<compile_context>
chip_gen: v5e
topology: v5e:2x2
jax: 0.10.0
libtpu: 0.0.40
codegen_flags: <defaults>
</compile_context>

<pallas_src>
import functools

import jax
import jax.numpy as jnp
from jax.experimental import pallas as pl
from jax.experimental.pallas import tpu as pltpu

_NEG_PAD = -1e30  # padded-vocab-column fill; exp(_NEG_PAD - m) underflows to 0


def _round_up(x, m):
    return ((x + m - 1) // m) * m


def _physical_vmem_bytes():
    try:
        return int(pltpu.get_tpu_info().vmem_capacity_bytes)
    except Exception:
        return 64 * 1024 * 1024  # conservative fallback: v7x per-TensorCore VMEM


def _choose_tile_n(n, vp, *, vmem_budget, want_loss, max_tile=1024):
    """Row-tile size that fits the pipelined footprint on every generation."""
    table_bytes = 2 * vp * vp * 4                        # resident table (2 bufs)
    stream_row = 2 * (vp * 4 + 4 + (8 if want_loss else 0))  # logits + tok (+lab,loss), 2 bufs
    temps_row = (4 if want_loss else 2) * vp * 4         # onehot/logits/exp/where temps
    per_row = stream_row + temps_row
    avail = max(vmem_budget - table_bytes, per_row * 8)
    tn = min(max_tile, avail // per_row)
    tn = max(8, (tn // 8) * 8)                           # (8,128) sublane constraint
    tn = min(tn, _round_up(n, 8))
    # Keep at least two grid steps so v7x's second TensorCore gets work.
    tn = min(tn, max(8, _round_up((n + 1) // 2, 8)))
    return tn


def _compute_logits(tok_ref, emb_ref):
    """Embedding lookup as one-hot @ table on the MXU (fine at small Vp)."""
    tn = tok_ref.shape[0]
    vp = emb_ref.shape[1]
    col_ids = jax.lax.broadcasted_iota(jnp.int32, (tn, vp), 1)      # (TN, Vp)
    onehot = (tok_ref[...] == col_ids).astype(jnp.float32)          # (TN, Vp)
    logits = jnp.dot(onehot, emb_ref[...],
                     preferred_element_type=jnp.float32)            # (TN, Vp)
    return logits, col_ids


def _logits_kernel(tok_ref, emb_ref, logits_ref):
    logits, _ = _compute_logits(tok_ref, emb_ref)
    logits_ref[...] = logits                                        # lane-dense store


def _logits_loss_kernel(tok_ref, lab_ref, emb_ref, logits_ref, loss_ref,
                        *, n_valid, rows_padded):
    logits, col_ids = _compute_logits(tok_ref, emb_ref)
    logits_ref[...] = logits                                        # lane-dense store

    # Cross-entropy per row.  Padded vocab columns already hold -1e30 (set in
    # the wrapper), so they vanish from the logsumexp with no masking ops.
    m = jnp.max(logits, axis=-1, keepdims=True)                     # (TN, 1)
    lse = m + jnp.log(jnp.sum(jnp.exp(logits - m), axis=-1, keepdims=True))
    correct = jnp.sum(jnp.where(lab_ref[...] == col_ids, logits, 0.0),
                      axis=-1, keepdims=True)                       # (TN, 1)
    per_row = lse - correct
    if rows_padded:  # static: only emitted when Np > N
        tn = tok_ref.shape[0]
        row_ids = (pl.program_id(0) * tn
                   + jax.lax.broadcasted_iota(jnp.int32, (tn, 1), 0))
        per_row = jnp.where(row_ids < n_valid, per_row, 0.0)
    loss_ref[...] = per_row


def bigram_forward(sequences, labels, emb_table, *, max_tile_n=1024):
    """Pallas equivalent of BigramModel.forward(sequences, labels)."""
    B, T = sequences.shape
    V = emb_table.shape[0]
    N = B * T
    Vp = _round_up(V, 128)                       # lane-dense vocab axis
    want_loss = labels is not None

    phys_vmem = _physical_vmem_bytes()
    vmem_limit = (phys_vmem * 3) // 4            # ~96 MiB v5e/v6e, ~48 MiB v7x
    TN = _choose_tile_n(N, Vp, vmem_budget=vmem_limit - (2 << 20),
                        want_loss=want_loss, max_tile=max_tile_n)
    Np = _round_up(N, TN)
    num_tiles = Np // TN
    rows_padded = Np != N

    tok = sequences.reshape(N, 1).astype(jnp.int32)
    if rows_padded:
        tok = jnp.pad(tok, ((0, Np - N), (0, 0)))

    emb = emb_table.astype(jnp.float32)
    if Vp != V:
        # Pad extra rows with 0 and extra *columns* with -1e30 so padded
        # columns drop out of the logsumexp without in-kernel masking.
        emb = jnp.pad(emb, ((0, Vp - V), (0, 0)))
        emb = jnp.concatenate(
            [emb, jnp.full((Vp, Vp - V), _NEG_PAD, jnp.float32)], axis=1)

    compiler_params = pltpu.CompilerParams(
        dimension_semantics=("parallel",),       # no cross-tile state -> megacore OK
        vmem_limit_bytes=int(vmem_limit))

    tok_spec = pl.BlockSpec((TN, 1), lambda i: (i, 0))
    emb_spec = pl.BlockSpec((Vp, Vp), lambda i: (0, 0))   # table resident across tiles
    logits_spec = pl.BlockSpec((TN, Vp), lambda i: (i, 0))

    if want_loss:
        lab = labels.reshape(N, 1).astype(jnp.int32)
        if rows_padded:
            lab = jnp.pad(lab, ((0, Np - N), (0, 0)))
        kernel = functools.partial(_logits_loss_kernel, n_valid=N,
                                   rows_padded=rows_padded)
        logits_p, per_row_loss = pl.pallas_call(
            kernel,
            out_shape=(
                jax.ShapeDtypeStruct((Np, Vp), jnp.float32),
                jax.ShapeDtypeStruct((Np, 1), jnp.float32),
            ),
            grid=(num_tiles,),
            in_specs=[tok_spec,
                      pl.BlockSpec((TN, 1), lambda i: (i, 0)),
                      emb_spec],
            out_specs=(logits_spec,
                       pl.BlockSpec((TN, 1), lambda i: (i, 0))),
            compiler_params=compiler_params,
        )(tok, lab, emb)
        loss = jnp.sum(per_row_loss) / N
    else:
        logits_p = pl.pallas_call(
            _logits_kernel,
            out_shape=jax.ShapeDtypeStruct((Np, Vp), jnp.float32),
            grid=(num_tiles,),
            in_specs=[tok_spec, emb_spec],
            out_specs=logits_spec,
            compiler_params=compiler_params,
        )(tok, emb)
        loss = None

    if Vp == V and Np == N:
        prediction_scores = logits_p.reshape(B, T, V)     # no slice copy needed
    else:
        prediction_scores = logits_p[:N, :V].reshape(B, T, V)
    return prediction_scores, loss


if __name__ == "__main__":
    # Small deterministic setup consistent with the module:
    # character-level vocab, batch=2, seq=8.
    V = 64   # vocabulary_size
    B, T = 2, 8

    key = jax.random.PRNGKey(0)
    k_emb, k_tok, k_lab = jax.random.split(key, 3)

    # nn.Embedding default init: N(0, 1)
    emb_table = jax.random.normal(k_emb, (V, V), dtype=jnp.float32)
    sequences = jax.random.randint(k_tok, (B, T), 0, V, dtype=jnp.int32)
    labels = jax.random.randint(k_lab, (B, T), 0, V, dtype=jnp.int32)

    scores, loss = bigram_forward(sequences, labels, emb_table)
    jax.block_until_ready((scores, loss))

    # Pure-JAX reference check (embedding gather + cross-entropy).
    ref_scores = emb_table[sequences]                       # (B, T, V)
    flat = ref_scores.reshape(-1, V)
    lab_flat = labels.reshape(-1)
    lse = jax.scipy.special.logsumexp(flat, axis=-1)
    ref_loss = jnp.mean(lse - flat[jnp.arange(flat.shape[0]), lab_flat])

    assert scores.shape == (B, T, V)
    assert jnp.allclose(scores, ref_scores, atol=1e-5, rtol=1e-5)
    assert jnp.allclose(loss, ref_loss, atol=1e-5, rtol=1e-5)

    # Logits-only path (labels=None) must also work (CE block compiled out).
    scores_only, loss_none = bigram_forward(sequences, None, emb_table)
    jax.block_until_ready(scores_only)
    assert loss_none is None
    assert jnp.allclose(scores_only, ref_scores, atol=1e-5, rtol=1e-5)

    print("KERNEL_OK")
</pallas_src>

<mosaic_0001>
module attributes {stable_mosaic.version = 11 : i64} {
  func.func @_logits_loss_kernel(%arg0: i32, %arg1: memref<8x1xi32, #tpu.memory_space<vmem>>, %arg2: memref<8x1xi32, #tpu.memory_space<vmem>>, %arg3: memref<128x128xf32, #tpu.memory_space<vmem>>, %arg4: memref<8x128xf32, #tpu.memory_space<vmem>>, %arg5: memref<8x1xf32, #tpu.memory_space<vmem>>) attributes {dimension_semantics = [#tpu.dimension_semantics<parallel>], iteration_bounds = array<i64: 2>, scalar_prefetch = 0 : i64, scratch_operands = 0 : i64, tpu.core_type = #tpu.core_type<tc>, window_params = [{transform_indices = @transform_0, window_bounds = array<i64: 8, 1>}, {transform_indices = @transform_1, window_bounds = array<i64: 8, 1>}, {pipeline_mode = #tpu.pipeline_mode<synchronous>, transform_indices = @transform_2, window_bounds = array<i64: 128, 128>}, {transform_indices = @transform_3, window_bounds = array<i64: 8, 128>}, {transform_indices = @transform_4, window_bounds = array<i64: 8, 1>}]} {
    %0 = tpu.iota {dimensions = array<i32: 1>} : vector<8x128xi32>
    %c0 = arith.constant 0 : index
    %c0_0 = arith.constant 0 : index
    %1 = vector.load %arg1[%c0, %c0_0] : memref<8x1xi32, #tpu.memory_space<vmem>>, vector<8x1xi32>
    %2 = vector.broadcast %1 : vector<8x1xi32> to vector<8x128xi32>
    %3 = arith.cmpi eq, %2, %0 : vector<8x128xi32>
    %4 = arith.extui %3 : vector<8x128xi1> to vector<8x128xi32>
    %5 = arith.sitofp %4 : vector<8x128xi32> to vector<8x128xf32>
    %c0_1 = arith.constant 0 : index
    %c0_2 = arith.constant 0 : index
    %6 = vector.load %arg3[%c0_1, %c0_2] : memref<128x128xf32, #tpu.memory_space<vmem>>, vector<128x128xf32>
    %cst = arith.constant dense<0.000000e+00> : vector<8x128xf32>
    %7 = tpu.matmul %5, %6, %cst {dimension_numbers = #tpu.dot_dimension_numbers<[1], [0], [0], [1], [0, 0, 1, 1], [], []>} : vector<8x128xf32>, vector<128x128xf32>, vector<8x128xf32> -> vector<8x128xf32>
    %c0_3 = arith.constant 0 : index
    %c0_4 = arith.constant 0 : index
    %8 = vector.load %arg4[%c0_3, %c0_4] : memref<8x128xf32, #tpu.memory_space<vmem>>, vector<8x128xf32>
    tpu.vector_store %arg4[%c0_3, %c0_4], %7 {strides = array<i32>} : memref<8x128xf32, #tpu.memory_space<vmem>>, vector<8x128xf32>,
    %cst_5 = arith.constant dense<0xFF800000> : vector<8xf32>
    %9 = vector.multi_reduction <maximumf>, %7, %cst_5 [1] : vector<8x128xf32> to vector<8xf32>
    %10 = vector.shape_cast %9 : vector<8xf32> to vector<8x1xf32>
    %11 = vector.broadcast %10 : vector<8x1xf32> to vector<8x128xf32>
    %12 = arith.subf %7, %11 : vector<8x128xf32>
    %13 = math.exp %12 : vector<8x128xf32>
    %cst_6 = arith.constant dense<0.000000e+00> : vector<8xf32>
    %14 = vector.multi_reduction <add>, %13, %cst_6 [1] : vector<8x128xf32> to vector<8xf32>
    %15 = vector.shape_cast %14 : vector<8xf32> to vector<8x1xf32>
    %16 = math.log %15 : vector<8x1xf32>
    %17 = arith.addf %10, %16 : vector<8x1xf32>
    %c0_7 = arith.constant 0 : index
    %c0_8 = arith.constant 0 : index
    %18 = vector.load %arg2[%c0_7, %c0_8] : memref<8x1xi32, #tpu.memory_space<vmem>>, vector<8x1xi32>
    %19 = vector.broadcast %18 : vector<8x1xi32> to vector<8x128xi32>
    %20 = arith.cmpi eq, %19, %0 : vector<8x128xi32>
    %cst_9 = arith.constant 0.000000e+00 : f32
    %21 = vector.broadcast %cst_9 : f32 to vector<8x128xf32>
    %22 = arith.select %20, %7, %21 : vector<8x128xi1>, vector<8x128xf32>
    %cst_10 = arith.constant dense<0.000000e+00> : vector<8xf32>
    %23 = vector.multi_reduction <add>, %22, %cst_10 [1] : vector<8x128xf32> to vector<8xf32>
    %24 = vector.shape_cast %23 : vector<8xf32> to vector<8x1xf32>
    %25 = arith.subf %17, %24 : vector<8x1xf32>
    %c0_11 = arith.constant 0 : index
    %c0_12 = arith.constant 0 : index
    %26 = vector.load %arg5[%c0_11, %c0_12] : memref<8x1xf32, #tpu.memory_space<vmem>>, vector<8x1xf32>
    tpu.vector_store %arg5[%c0_11, %c0_12], %25 {strides = array<i32>} : memref<8x1xf32, #tpu.memory_space<vmem>>, vector<8x1xf32>,
    return
  }
  func.func @transform_0(%arg0: i32) -> (i32, i32) {
    %c0_i32 = arith.constant 0 : i32
    %c0_i32_0 = arith.constant 0 : i32
    return %arg0, %c0_i32 : i32, i32
  }
  func.func @transform_1(%arg0: i32) -> (i32, i32) {
    %c0_i32 = arith.constant 0 : i32
    %c0_i32_0 = arith.constant 0 : i32
    return %arg0, %c0_i32 : i32, i32
  }
  func.func @transform_2(%arg0: i32) -> (i32, i32) {
    %c0_i32 = arith.constant 0 : i32
    %c0_i32_0 = arith.constant 0 : i32
    %c0_i32_1 = arith.constant 0 : i32
    return %c0_i32, %c0_i32_0 : i32, i32
  }
  func.func @transform_3(%arg0: i32) -> (i32, i32) {
    %c0_i32 = arith.constant 0 : i32
    %c0_i32_0 = arith.constant 0 : i32
    return %arg0, %c0_i32 : i32, i32
  }
  func.func @transform_4(%arg0: i32) -> (i32, i32) {
    %c0_i32 = arith.constant 0 : i32
    %c0_i32_0 = arith.constant 0 : i32
    return %arg0, %c0_i32 : i32, i32
  }
}

</mosaic_0001>

<llo_original>
// kernel: tpu_custom_call.1
$region0: #{tpu_custom_call.1}
  #allocation0 [shape = 'u32[]', space=smem, size = 0x4, offset = 0x4, fixed_abs, tag = 'smem constant byte address 0x4 - core index']
  #allocation1 [shape = 'u32[72,128]{1,0:T(1,128)}', space=vmem, size = 0x9000, scoped, tag = 'internal scratch']
  %s0 = inlined_call_operand.vmem [shape: s32[16,1], index: 0, kind: input, shape index: {}]
  %s1 = inlined_call_operand.vmem [shape: s32[16,1], index: 1, kind: input, shape index: {}]
  %s2 = inlined_call_operand.hbm [shape: f32[128,128], index: 2, kind: input, shape index: {}]
  %s3 = inlined_call_operand.hbm [shape: f32[16,128], index: 3, kind: output, shape index: {0}]
  %s4 = inlined_call_operand.vmem [shape: f32[16,1], index: 4, kind: output, shape index: {1}]
  %5 = xla_tuple %s3, %s4
  %s6 = sld [smem:[#allocation0]]
  $region57: #{tpu_custom_call.1} parent=0
    _
  %s8 = ssub.s32 1, %s6
  %s9 = scalar_select 0, %s8, %s6
  $region1: #{tpu_custom_call.1} parent=0
    #allocation2 [shape = 'u8[65536]{0}', space=vmem, size = 0x10000, scoped, tag = 'input window, operand 2, single buffered']
    #allocation3 [shape = 's32[2]{0}', space=sflag, size = 0x8, scoped, tag = 'scoped memory for tpu_custom_call.1']
    #allocation4 [shape = 's32[2]{0}', space=sflag, size = 0x8, scoped, tag = 'scoped memory for tpu_custom_call.1']
    #allocation5 [shape = 'u8[8192]{0}', space=vmem, size = 0x2000, scoped, tag = 'output window, operand 0']
    %10 = vsyncpa [#allocation3], 0
    %11 = vsyncpa [#allocation4], 0
    %s12 = scalar_lea.sflag [#allocation4], 1
    %13 = vsyncpa %s12, 0
    loop: start=0, step=1, limit=4
    $region2: #{tpu_custom_call.1} parent=1 // loop_pre_header
      _
    $region3: #{tpu_custom_call.1} parent=1 // loop_header
      %s15 = sphi 0, %s19
      %p16 = scmp.ge.s32.totalorder %s15, 4
      %s25 = sphi 0, %s27
      %s28 = sphi 0, %s25
      %s29 = sphi 0, %s28
      %s45 = sphi 0, %s29
      %s51 = sphi 0, %s53
      %s54 = sphi 0, %s51
      %s55 = sphi 0, %s54
      %s71 = sphi 0, %s55
      %s75 = sphi 0, %s75
      %s77 = sphi 0, %s75
      %s78 = sphi 0, %s77
      %s92 = sphi 0, %s78
      %s98 = sphi 0, %s100
      %s101 = sphi 0, %s98
      %s102 = sphi 0, %s101
      %s118 = sphi 0, %s102
      %s124 = sphi 0, %s126
      %s127 = sphi 0, %s124
      %s128 = sphi 0, %s127
      %s144 = sphi 0, %s128
    $region4: #{tpu_custom_call.1} parent=1 // loop_header_branch
      %18 = sbr.rel (%p16) target = $region8
    $region5: #{tpu_custom_call.1} parent=1 // loop_body
      %s20 = ssub.s32 %s15, 1
      %s21 = ssub.s32 %s15, 2
      %s22 = sadd.s32 %s15, 1
      %s23 = ssub.s32 %s15, %s22
      %p24 = scmp.eq.s32.totalorder %s23, 0
      %s26 = sadd.s32 %s25, 1
      %s27 = scalar_select %p24, %s25, %s26
      %p30 = pneg %p24
      %p31 = scmp.eq.s32.totalorder %s15, 1
      %p32 = por %p30, %p31
      %p33 = scmp.ne.s32.totalorder %s25, %s28
      %p34 = scmp.eq.s32.totalorder %s15, 0
      %p35 = por %p33, %p34
      %p36 = scmp.ne.s32.totalorder %s25, %s28
      %p37 = scmp.eq.s32.totalorder %s20, 1
      %p38 = por %p36, %p37
      %p39 = scmp.ne.s32.totalorder %s28, %s29
      %p40 = scmp.eq.s32.totalorder %s20, 0
      %p41 = por %p39, %p40
      %p42 = scmp.ne.s32.totalorder %s28, %s29
      %p43 = scmp.eq.s32.totalorder %s21, 1
      %p44 = por %p42, %p43
      %p46 = scmp.ne.s32.totalorder %s29, %s45
      %p47 = scmp.eq.s32.totalorder %s21, 0
      %p48 = por %p46, %p47
      %s49 = ssub.s32 %s15, %s22
      %p50 = scmp.eq.s32.totalorder %s49, 0
      %s52 = sadd.s32 %s51, 1
      %s53 = scalar_select %p50, %s51, %s52
      %p56 = pneg %p50
      %p57 = scmp.eq.s32.totalorder %s15, 1
      %p58 = por %p56, %p57
      %p59 = scmp.ne.s32.totalorder %s51, %s54
      %p60 = scmp.eq.s32.totalorder %s15, 0
      %p61 = por %p59, %p60
      %p62 = scmp.ne.s32.totalorder %s51, %s54
      %p63 = scmp.eq.s32.totalorder %s20, 1
      %p64 = por %p62, %p63
      %p65 = scmp.ne.s32.totalorder %s54, %s55
      %p66 = scmp.eq.s32.totalorder %s20, 0
      %p67 = por %p65, %p66
      %p68 = scmp.ne.s32.totalorder %s54, %s55
      %p69 = scmp.eq.s32.totalorder %s21, 1
      %p70 = por %p68, %p69
      %p72 = scmp.ne.s32.totalorder %s55, %s71
      %p73 = scmp.eq.s32.totalorder %s21, 0
      %p74 = por %p72, %p73
      %s76 = sadd.s32 %s75, 1
      %p79 = scmp.eq.s32.totalorder %s15, 1
      %p80 = scmp.ne.s32.totalorder %s75, %s77
      %p81 = scmp.eq.s32.totalorder %s15, 0
      %p82 = por %p80, %p81
      %p83 = scmp.ne.s32.totalorder %s75, %s77
      %p84 = scmp.eq.s32.totalorder %s20, 1
      %p85 = por %p83, %p84
      %p86 = scmp.ne.s32.totalorder %s77, %s78
      %p87 = scmp.eq.s32.totalorder %s20, 0
      %p88 = por %p86, %p87
      %p89 = scmp.ne.s32.totalorder %s77, %s78
      %p90 = scmp.eq.s32.totalorder %s21, 1
      %p91 = por %p89, %p90
      %p93 = scmp.ne.s32.totalorder %s78, %s92
      %p94 = scmp.eq.s32.totalorder %s21, 0
      %p95 = por %p93, %p94
      %s96 = ssub.s32 %s15, %s22
      %p97 = scmp.eq.s32.totalorder %s96, 0
      %s99 = sadd.s32 %s98, 1
      %s100 = scalar_select %p97, %s98, %s99
      %p103 = pneg %p97
      %p104 = scmp.eq.s32.totalorder %s15, 1
      %p105 = por %p103, %p104
      %p106 = scmp.ne.s32.totalorder %s98, %s101
      %p107 = scmp.eq.s32.totalorder %s15, 0
      %p108 = por %p106, %p107
      %p109 = scmp.ne.s32.totalorder %s98, %s101
      %p110 = scmp.eq.s32.totalorder %s20, 1
      %p111 = por %p109, %p110
      %p112 = scmp.ne.s32.totalorder %s101, %s102
      %p113 = scmp.eq.s32.totalorder %s20, 0
      %p114 = por %p112, %p113
      %p115 = scmp.ne.s32.totalorder %s101, %s102
      %p116 = scmp.eq.s32.totalorder %s21, 1
      %p117 = por %p115, %p116
      %p119 = scmp.ne.s32.totalorder %s102, %s118
      %p120 = scmp.eq.s32.totalorder %s21, 0
      %p121 = por %p119, %p120
      %s122 = ssub.s32 %s15, %s22
      %p123 = scmp.eq.s32.totalorder %s122, 0
      %s125 = sadd.s32 %s124, 1
      %s126 = scalar_select %p123, %s124, %s125
      %p129 = pneg %p123
      %p130 = scmp.eq.s32.totalorder %s15, 1
      %p131 = por %p129, %p130
      %p132 = scmp.ne.s32.totalorder %s124, %s127
      %p133 = scmp.eq.s32.totalorder %s15, 0
      %p134 = por %p132, %p133
      %p135 = scmp.ne.s32.totalorder %s124, %s127
      %p136 = scmp.eq.s32.totalorder %s20, 1
      %p137 = por %p135, %p136
      %p138 = scmp.ne.s32.totalorder %s127, %s128
      %p139 = scmp.eq.s32.totalorder %s20, 0
      %p140 = por %p138, %p139
      %p141 = scmp.ne.s32.totalorder %s127, %s128
      %p142 = scmp.eq.s32.totalorder %s21, 1
      %p143 = por %p141, %p142
      %p145 = scmp.ne.s32.totalorder %s128, %s144
      %p146 = scmp.eq.s32.totalorder %s21, 0
      %p147 = por %p145, %p146
      %p148 = scmp.le.s32.totalorder 1, %s15
      %p149 = scmp.lt.s32.totalorder %s15, 3
      %p150 = pnand %p148, %p149
      %p151 = pneg %p150
      // Predicated region
      $region9: #{tpu_custom_call.1} parent=5 // pred_check
        _
      $region10: #{tpu_custom_call.1} parent=5 // pred_check_branch
        %153 = sbr.rel (%p150) target = $region12
      $region11: #{tpu_custom_call.1} parent=5 // pred_region
        %s154 = ssub.s32 %s15, 1
        // Predicated region
        $region13: #{tpu_custom_call.1} parent=11 // pred_check
          %p155 = pneg %p88
        $region14: #{tpu_custom_call.1} parent=11 // pred_check_branch
          %157 = sbr.rel (%p155) target = $region16
        $region15: #{tpu_custom_call.1} parent=11 // pred_region
          %159 = vsyncadd [#allocation3], 0
          %s160 = sshll.u32 %s2, 4
          %s161 = int_to_ptr.hbm [resolvable:$true] %s160
          %s162 = sshll.u32 [#allocation2], 4
          %s163 = int_to_ptr.vmem [resolvable:$true] %s162
          %168 = dma.hbm_to_vmem [thread:$0]  %s161, 2048, %s163, [#allocation3], 128, 128, 8
        $region16: #{tpu_custom_call.1} parent=11 // pred_fallthru
          _
      $region12: #{tpu_custom_call.1} parent=5 // pred_fallthru
        _
      %p169 = scmp.lt.s32.totalorder %s15, 2
      // Predicated region
      $region17: #{tpu_custom_call.1} parent=5 // pred_check
        %p170 = pneg %p169
      $region18: #{tpu_custom_call.1} parent=5 // pred_check_branch
        %172 = sbr.rel (%p170) target = $region20
      $region19: #{tpu_custom_call.1} parent=5 // pred_region
        // Predicated region
        $region21: #{tpu_custom_call.1} parent=19 // pred_check
          %p173 = pneg %p35
        $region22: #{tpu_custom_call.1} parent=19 // pred_check_branch
          %175 = sbr.rel (%p173) target = $region24
        $region23: #{tpu_custom_call.1} parent=19 // pred_region
          %p176 = scmp.lt.s32.totalorder %s15, 1
          %s177 = scalar_select %p176, %s15, 1
          %s178 = smul.addr %s177, 8
          %s179 = scalar_lea.vmem %s0, %s178
        $region24: #{tpu_custom_call.1} parent=19 // pred_fallthru
          _
        // Predicated region
        $region25: #{tpu_custom_call.1} parent=19 // pred_check
          %p180 = pneg %p61
        $region26: #{tpu_custom_call.1} parent=19 // pred_check_branch
          %182 = sbr.rel (%p180) target = $region28
        $region27: #{tpu_custom_call.1} parent=19 // pred_region
          %p183 = scmp.lt.s32.totalorder %s15, 1
          %s184 = scalar_select %p183, %s15, 1
          %s185 = smul.addr %s184, 8
          %s186 = scalar_lea.vmem %s1, %s185
        $region28: #{tpu_custom_call.1} parent=19 // pred_fallthru
          _
      $region20: #{tpu_custom_call.1} parent=5 // pred_fallthru
        _
      %p187 = scmp.le.s32.totalorder 1, %s15
      %p188 = scmp.lt.s32.totalorder %s15, 3
      %p189 = pnand %p187, %p188
      %p190 = pneg %p189
      // Predicated region
      $region29: #{tpu_custom_call.1} parent=5 // pred_check
        _
      $region30: #{tpu_custom_call.1} parent=5 // pred_check_branch
        %192 = sbr.rel (%p189) target = $region32
      $region31: #{tpu_custom_call.1} parent=5 // pred_region
        %s193 = ssub.s32 %s15, 1
        // Predicated region
        $region33: #{tpu_custom_call.1} parent=31 // pred_check
          %p194 = pneg %p88
        $region34: #{tpu_custom_call.1} parent=31 // pred_check_branch
          %196 = sbr.rel (%p194) target = $region36
        $region35: #{tpu_custom_call.1} parent=31 // pred_region
          %198 = dma.done [#allocation3], 2048
        $region36: #{tpu_custom_call.1} parent=31 // pred_fallthru
          _
        %p199 = scmp.lt.s32.totalorder %s20, 1
        %s200 = scalar_select %p199, %s20, 1
        %s201 = smul.addr %s200, 8
        %s202 = scalar_lea.vmem %s0, %s201
        %p203 = pneg %p41
        %p204 = pneg %p38
        %p205 = scmp.lt.s32.totalorder %s20, 1
        %s206 = scalar_select %p205, %s20, 1
        %s207 = smul.addr %s206, 8
        %s208 = scalar_lea.vmem %s1, %s207
        %p209 = pneg %p67
        %p210 = pneg %p64
        %p211 = pneg %p88
        %p212 = pneg %p85
        %p213 = pneg %p114
        %p214 = pneg %p111
        %s215 = sand.u32 %s101, 1
        %s216 = scalar_lea.sflag [#allocation4], %s215
        %s217 = sand.u32 %s101, 1
        %s218 = smul.addr %s217, 8
        %s219 = scalar_lea.vmem [#allocation5], %s218
        %p220 = pneg %p140
        %p221 = pneg %p137
        %p222 = scmp.lt.s32.totalorder %s20, 1
        %s223 = scalar_select %p222, %s20, 1
        %s224 = smul.addr %s223, 8
        %s225 = scalar_lea.vmem %s4, %s224
        %p226 = scmp.lt.s32.totalorder %s20, 1
        %s227 = scalar_select %p226, %s20, 1
        %s228 = smul.addr %s227, 8
        %s229 = scalar_lea.vmem %s0, %s228
        %p230 = scmp.lt.s32.totalorder %s20, 1
        %s231 = scalar_select %p230, %s20, 1
        %s232 = smul.addr %s231, 8
        %s233 = scalar_lea.vmem %s1, %s232
        %p234 = scmp.lt.s32.totalorder %s20, 1
        %s235 = scalar_select %p234, %s20, 1
        %s236 = smul.addr %s235, 8
        %s237 = scalar_lea.vmem %s4, %s236
        %v238 = vlaneseq
        %v239 = vand.u32 %v238, 127
        %v240 = vld [vmem:[%s229] sm:$0xff]
        %241 = vset.pattern.permute.xlu0 0
        %242 = vperm.xlu0 %241, %v240
        %v243 = vpop.permute.xlu0 %242
        %vm244 = vcmp.eq.s32.totalorder %v243, %v239
        %v245 = vsel %vm244, 1, 0
        %v246 = vcvt.s32.f32 %v245
        %v247 = vld [vmem:[#allocation2] sm:$0xff]
        %v248 = vld [vmem:[#allocation2 + $0x8] sm:$0xff]
        %v249 = vld [vmem:[#allocation2 + $0x10] sm:$0xff]
        %v250 = vld [vmem:[#allocation2 + $0x18] sm:$0xff]
        %v251 = vld [vmem:[#allocation2 + $0x20] sm:$0xff]
        %v252 = vld [vmem:[#allocation2 + $0x28] sm:$0xff]
        %v253 = vld [vmem:[#allocation2 + $0x30] sm:$0xff]
        %v254 = vld [vmem:[#allocation2 + $0x38] sm:$0xff]
        %v255 = vld [vmem:[#allocation2 + $0x40] sm:$0xff]
        %v256 = vld [vmem:[#allocation2 + $0x48] sm:$0xff]
        %v257 = vld [vmem:[#allocation2 + $0x50] sm:$0xff]
        %v258 = vld [vmem:[#allocation2 + $0x58] sm:$0xff]
        %v259 = vld [vmem:[#allocation2 + $0x60] sm:$0xff]
        %v260 = vld [vmem:[#allocation2 + $0x68] sm:$0xff]
        %v261 = vld [vmem:[#allocation2 + $0x70] sm:$0xff]
        %v262 = vld [vmem:[#allocation2 + $0x78] sm:$0xff]
        %263 = vmatpush.msra.mxu0 %v262
        %264 = vmatpush.msra.mxu0 %v261
        %265 = vmatpush.msra.mxu0 %v260
        %266 = vmatpush.msra.mxu0 %v259
        %267 = vmatpush.msra.mxu0 %v258
        %268 = vmatpush.msra.mxu0 %v257
        %269 = vmatpush.msra.mxu0 %v256
        %270 = vmatpush.msra.mxu0 %v255
        %271 = vmatpush.msra.mxu0 %v254
        %272 = vmatpush.msra.mxu0 %v253
        %273 = vmatpush.msra.mxu0 %v252
        %274 = vmatpush.msra.mxu0 %v251
        %275 = vmatpush.msra.mxu0 %v250
        %276 = vmatpush.msra.mxu0 %v249
        %277 = vmatpush.msra.mxu0 %v248
        %278 = vmatpush.msra.mxu0 %v247
        %279 = vmatmul.f32.gmra.mxu0 %v246
        %v280 = vpop.f32.mrf.mxu0
        %v281 = vadd.f32 0.0, %v280
        %282 = vdwg.mxu0
        %283 = vst [vmem:[%s219] sm:$0xff] %v281
        %284 = vmax.xlane.f32.xlu0 %v281
        %v285 = vpop.xlane.xlu0 %284
        %v286 = vsub.f32 %v281, %v285
        %v287 = vmul.f32 %v286, 1.442695
        %v288 = vpow.pop %v287
        %289 = vadd.xlane.f32.xlu0 %v288
        %v290 = vpop.xlane.xlu0 %289
        %v291 = vlog2.pop %v290
        %v292 = vmul.f32 %v291, 0.6931472
        %v293 = vadd.f32 %v285, %v292
        %v294 = vld [vmem:[%s233] sm:$0xff]
        %295 = vset.pattern.permute.xlu0 0
        %296 = vperm.xlu0 %295, %v294
        %v297 = vpop.permute.xlu0 %296
        %vm298 = vcmp.eq.s32.totalorder %v297, %v239
        %v299 = vsel %vm298, %v281, 0.0
        %300 = vadd.xlane.f32.xlu0 %v299
        %v301 = vpop.xlane.xlu0 %300
        %v302 = vsub.f32 %v293, %v301
        %vm303 = vcmask 7168
        %304 = vst.msk [vmem:[%s237] sm:$0xff] %vm303, %v302
        %s305 = sand.u32 %s101, 1
        %s306 = scalar_lea.sflag [#allocation4], %s305
        %s307 = sand.u32 %s101, 1
        %s308 = smul.addr %s307, 8
        %s309 = scalar_lea.vmem [#allocation5], %s308
        %p310 = scmp.lt.s32.totalorder %s20, 1
        %s311 = scalar_select %p310, %s20, 1
        %s312 = smul.addr %s311, 8
        %s313 = scalar_lea.vmem %s4, %s312
        // Predicated region
        $region37: #{tpu_custom_call.1} parent=31 // pred_check
          %p314 = pneg %p111
        $region38: #{tpu_custom_call.1} parent=31 // pred_check_branch
          %316 = sbr.rel (%p314) target = $region40
        $region39: #{tpu_custom_call.1} parent=31 // pred_region
          %318 = vsyncadd %s306, 0
          %s319 = smul.addr %s20, 8
          %s320 = scalar_lea.hbm %s3, %s319
          %s322 = sshll.u32 %s309, 4
          %s323 = int_to_ptr.vmem [resolvable:$true] %s322
          %s324 = sshll.u32 %s320, 4
          %s325 = int_to_ptr.hbm [resolvable:$true] %s324
          %327 = dma.vmem_to_hbm [thread:$0]  %s323, 128, %s325, %s306
        $region40: #{tpu_custom_call.1} parent=31 // pred_fallthru
          _
        // Predicated region
        $region41: #{tpu_custom_call.1} parent=31 // pred_check
          %p328 = pneg %p137
        $region42: #{tpu_custom_call.1} parent=31 // pred_check_branch
          %330 = sbr.rel (%p328) target = $region44
        $region43: #{tpu_custom_call.1} parent=31 // pred_region
          _
        $region44: #{tpu_custom_call.1} parent=31 // pred_fallthru
          _
      $region32: #{tpu_custom_call.1} parent=5 // pred_fallthru
        _
      %p331 = scmp.le.s32.totalorder 2, %s15
      // Predicated region
      $region45: #{tpu_custom_call.1} parent=5 // pred_check
        %p332 = pneg %p331
      $region46: #{tpu_custom_call.1} parent=5 // pred_check_branch
        %334 = sbr.rel (%p332) target = $region48
      $region47: #{tpu_custom_call.1} parent=5 // pred_region
        %s335 = ssub.s32 %s15, 2
        // Predicated region
        $region49: #{tpu_custom_call.1} parent=47 // pred_check
          %p336 = pneg %p117
        $region50: #{tpu_custom_call.1} parent=47 // pred_check_branch
          %338 = sbr.rel (%p336) target = $region52
        $region51: #{tpu_custom_call.1} parent=47 // pred_region
          %s339 = sand.u32 %s102, 1
          %s340 = scalar_lea.sflag [#allocation4], %s339
          %s341 = sand.u32 %s102, 1
          %s342 = smul.addr %s341, 8
          %s343 = scalar_lea.vmem [#allocation5], %s342
          %345 = dma.done %s340, 128
        $region52: #{tpu_custom_call.1} parent=47 // pred_fallthru
          _
        // Predicated region
        $region53: #{tpu_custom_call.1} parent=47 // pred_check
          %p346 = pneg %p143
        $region54: #{tpu_custom_call.1} parent=47 // pred_check_branch
          %348 = sbr.rel (%p346) target = $region56
        $region55: #{tpu_custom_call.1} parent=47 // pred_region
          %p349 = scmp.lt.s32.totalorder %s21, 1
          %s350 = scalar_select %p349, %s21, 1
          %s351 = smul.addr %s350, 8
          %s352 = scalar_lea.vmem %s4, %s351
        $region56: #{tpu_custom_call.1} parent=47 // pred_fallthru
          _
      $region48: #{tpu_custom_call.1} parent=5 // pred_fallthru
        _
    $region6: #{tpu_custom_call.1} parent=1 // loop_footer
      %s19 = sadd.s32 1, %s15
    $region7: #{tpu_custom_call.1} parent=1 // loop_footer_branch
      %14 = sbr.rel target = $region3
    $region8: #{tpu_custom_call.1} parent=1 // loop_exit
      _
    %353 = vsyncpa [#allocation3], 1
    %s354 = scalar_lea.sflag [#allocation3], 1
    %355 = vsyncpa %s354, 1
    %356 = vsyncpa [#allocation4], 1
    %s357 = scalar_lea.sflag [#allocation4], 1
    %358 = vsyncpa %s357, 1

</llo_original>
